<compile_context>
chip_gen: v7x
topology: tpu7x:2x2x1
jax: 0.10.0
libtpu: 0.0.40
codegen_flags: <defaults>
</compile_context>

<pallas_src>
import functools

import jax
import jax.numpy as jnp
import numpy as np
from jax.experimental import pallas as pl
from jax.experimental.pallas import tpu as pltpu


def channel_mixing_kernel(x_ref, mix_k_ref, mix_r_ref, wk_ref, wv_ref, wr_ref,
                          o_ref, carry_ref, *, matmul_dtype):
    t = pl.program_id(1)

    # ZeroPad2d((0,0,1,-1)) semantics: the shifted row at t == 0 is zero, so the
    # carry is reset at the start of every batch's sequence.
    @pl.when(t == 0)
    def _():
        carry_ref[...] = jnp.zeros_like(carry_ref)

    x = x_ref[...].astype(jnp.float32)        # (block_t, D), f32 compute
    carry = carry_ref[...]                    # (1, D): prev tile's last row

    # In-kernel time shift: xs[i] = x[i-1] for i>0, xs[0] = carry.
    # Sublane roll runs on the XLU slot -> effectively free next to the MXU.
    xs = pltpu.roll(x, shift=1, axis=0)
    row0 = jax.lax.broadcasted_iota(jnp.int32, x.shape, 0) == 0
    xs = jnp.where(row0, carry, xs)

    # Save this tile's last row for the next sequence tile (read-then-write
    # ordering on carry_ref is preserved).
    carry_ref[...] = x[-1:, :]

    mix_k = mix_k_ref[...].astype(jnp.float32)   # (1, D), broadcasts over rows
    mix_r = mix_r_ref[...].astype(jnp.float32)

    # k_in = x*mix_k + xs*(1-mix_k) == xs + (x - xs)*mix_k  (shared-delta form)
    delta = x - xs
    k_in = xs + delta * mix_k
    r_in = xs + delta * mix_r

    # MXU matmuls: operands in matmul_dtype (bf16 default), f32 accumulation,
    # f32 elementwise epilogue (safe on v5e's VPU).  bf16 shares f32's exponent
    # range, so square(relu(.)) cast to bf16 for the value matmul cannot
    # overflow; only mantissa precision is reduced.
    k = jnp.dot(k_in.astype(matmul_dtype), wk_ref[...],
                preferred_element_type=jnp.float32)
    k = jnp.square(jnp.maximum(k, 0.0))                    # square(relu(key(.)))
    v = jnp.dot(k.astype(matmul_dtype), wv_ref[...],
                preferred_element_type=jnp.float32)
    r = jax.nn.sigmoid(jnp.dot(r_in.astype(matmul_dtype), wr_ref[...],
                               preferred_element_type=jnp.float32))

    o_ref[...] = (r * v).astype(o_ref.dtype)


def _vmem_capacity_bytes():
    try:
        cap = getattr(pltpu.get_tpu_info(), "vmem_capacity_bytes", None)
        if cap:
            return int(cap)
    except Exception:
        pass
    return 64 * 2**20   # conservative fallback: v7x per-TensorCore VMEM


def _pick_tiling(T):
    """Return (block_t, padded_T) with an MXU-friendly M tile."""
    for cand in (512, 256, 128):
        if T % cand == 0:
            return cand, T
    if T > 128:
        bt = 256
        return bt, ((T + bt - 1) // bt) * bt
    # Small / toy sequences: one tile covering the 8-row-padded sequence.
    bt = max(8, ((T + 7) // 8) * 8)
    return bt, bt


def channel_mixing(x, mix_k, mix_r, wk, wv, wr, *,
                   matmul_dtype=jnp.bfloat16, block_t=None):
    B, T, D = x.shape
    x_dtype = np.dtype(x.dtype)
    matmul_dtype = np.dtype(matmul_dtype)

    auto_block = block_t is None
    if auto_block:
        block_t, Tp = _pick_tiling(T)
    else:
        Tp = -(-T // block_t) * block_t
    assert block_t % 8 == 0 or block_t == Tp, (block_t, Tp)

    vmem_cap = _vmem_capacity_bytes()
    w_bytes = 3 * D * D * matmul_dtype.itemsize          # single-buffered weights

    def _act_bytes(bt):
        io = 2 * 2 * bt * D * x_dtype.itemsize           # x in + out, double-buffered
        tmp = 8 * bt * D * 4                              # f32 temporaries
        return io + tmp

    # Shrink an auto-picked block_t if activations + resident weights would
    # overflow a safe fraction of this generation's VMEM (matters on v7x).
    if auto_block:
        while (w_bytes + _act_bytes(block_t) > int(0.6 * vmem_cap)
               and block_t % 16 == 0 and block_t >= 16):
            block_t //= 2
    n_t = Tp // block_t

    if Tp != T:
        # Pad at the end of the sequence; padded outputs are sliced off below.
        x = jnp.pad(x, ((0, 0), (0, Tp - T), (0, 0)))

    mix_k2 = mix_k.reshape(1, D).astype(x.dtype)
    mix_r2 = mix_r.reshape(1, D).astype(x.dtype)
    wk = wk.astype(matmul_dtype)
    wv = wv.astype(matmul_dtype)
    wr = wr.astype(matmul_dtype)

    need = w_bytes + _act_bytes(block_t) + 8 * D * 4
    vmem_limit = int(min(0.85 * vmem_cap, max(32 * 2**20, 2 * need)))

    def weight_spec():
        # Constant block index -> fetched once; single-buffer to halve VMEM cost.
        return pl.BlockSpec((D, D), lambda b, t: (0, 0),
                            pipeline_mode=pl.Buffered(1))

    cost = pl.CostEstimate(
        flops=6 * B * Tp * D * D,                 # three (T,D)x(D,D) matmuls
        transcendentals=B * Tp * D,               # sigmoid
        bytes_accessed=(2 * B * Tp * D * x_dtype.itemsize      # x read + out write
                        + 3 * D * D * matmul_dtype.itemsize
                        + 2 * D * x_dtype.itemsize),
    )

    out = pl.pallas_call(
        functools.partial(channel_mixing_kernel, matmul_dtype=matmul_dtype),
        out_shape=jax.ShapeDtypeStruct((B, Tp, D), x.dtype),
        grid_spec=pltpu.PrefetchScalarGridSpec(
            num_scalar_prefetch=0,
            grid=(B, n_t),
            in_specs=[
                pl.BlockSpec((None, block_t, D), lambda b, t: (b, t, 0)),   # x
                pl.BlockSpec((1, D), lambda b, t: (0, 0)),                  # mix_k
                pl.BlockSpec((1, D), lambda b, t: (0, 0)),                  # mix_r
                weight_spec(),                                              # key W
                weight_spec(),                                              # value W
                weight_spec(),                                              # receptance W
            ],
            out_specs=pl.BlockSpec((None, block_t, D), lambda b, t: (b, t, 0)),
            scratch_shapes=[pltpu.VMEM((1, D), jnp.float32)],               # shift carry
        ),
        compiler_params=pltpu.CompilerParams(
            # Batch axis is independent (megacore-shardable on v7x); the seq
            # axis carries the time-shift across tiles -> "arbitrary".
            dimension_semantics=("parallel", "arbitrary"),
            vmem_limit_bytes=vmem_limit,
        ),
        cost_estimate=cost,
    )(x, mix_k2, mix_r2, wk, wv, wr)

    return out[:, :T, :] if Tp != T else out


def channel_mixing_ref(x, mix_k, mix_r, wk, wv, wr, matmul_dtype=None):
    # Pure-JAX reference (same math as the PyTorch forward), with an optional
    # bf16-matmul variant mirroring the kernel's mixed-precision path.
    md = np.dtype(x.dtype if matmul_dtype is None else matmul_dtype)
    mk = mix_k.reshape(1, 1, -1)
    mr = mix_r.reshape(1, 1, -1)
    x_shift = jnp.pad(x, ((0, 0), (1, 0), (0, 0)))[:, :-1, :]
    k_in = x * mk + x_shift * (1.0 - mk)
    r_in = x * mr + x_shift * (1.0 - mr)
    k = jnp.square(jax.nn.relu(
        jnp.dot(k_in.astype(md), wk.astype(md), preferred_element_type=jnp.float32)))
    v = jnp.dot(k.astype(md), wv.astype(md), preferred_element_type=jnp.float32)
    r = jax.nn.sigmoid(
        jnp.dot(r_in.astype(md), wr.astype(md), preferred_element_type=jnp.float32))
    return (r * v).astype(x.dtype)


if __name__ == "__main__":
    B, T, D = 2, 16, 32   # small test; block_t=8 forces multiple sequence tiles

    key = jax.random.PRNGKey(0)
    kx, kmk, kmr, kwk, kwv, kwr = jax.random.split(key, 6)

    x = jax.random.normal(kx, (B, T, D), dtype=jnp.float32)
    # Module __init__ uses ones for the mix params (which would zero the shifted
    # path); use PRNG values so the time-shift carry is actually exercised.
    mix_k = jax.random.uniform(kmk, (1, 1, D), dtype=jnp.float32)
    mix_r = jax.random.uniform(kmr, (1, 1, D), dtype=jnp.float32)
    wk = jax.random.normal(kwk, (D, D), dtype=jnp.float32) * (1.0 / np.sqrt(D))
    wv = jax.random.normal(kwv, (D, D), dtype=jnp.float32) * (1.0 / np.sqrt(D))
    wr = jax.random.normal(kwr, (D, D), dtype=jnp.float32) * (1.0 / np.sqrt(D))
    # TODO(synk): self.ln_out is defined in __init__ but never used in forward(); omitted.

    # Exact f32 MXU path; block_t=8 -> 2 sequence tiles per batch, exercising
    # the in-kernel time-shift carry across tiles.
    out_f32 = jax.block_until_ready(
        channel_mixing(x, mix_k, mix_r, wk, wv, wr,
                       matmul_dtype=jnp.float32, block_t=8))
    ref_f32 = channel_mixing_ref(x, mix_k, mix_r, wk, wv, wr)
    np.testing.assert_allclose(np.asarray(out_f32), np.asarray(ref_f32),
                               rtol=1e-5, atol=1e-5)

    # Default bf16-MXU path (f32 accumulation + f32 epilogue), vs bf16 ref.
    out_bf16 = jax.block_until_ready(
        channel_mixing(x, mix_k, mix_r, wk, wv, wr, block_t=8))
    ref_bf16 = channel_mixing_ref(x, mix_k, mix_r, wk, wv, wr,
                                  matmul_dtype=jnp.bfloat16)
    np.testing.assert_allclose(np.asarray(out_bf16), np.asarray(ref_bf16),
                               rtol=2e-2, atol=2e-2)

    # Auto-tiled path (block_t picked by the wrapper).
    out_auto = jax.block_until_ready(
        channel_mixing(x, mix_k, mix_r, wk, wv, wr))
    np.testing.assert_allclose(np.asarray(out_auto), np.asarray(ref_bf16),
                               rtol=2e-2, atol=2e-2)

    print("KERNEL_OK")
</pallas_src>

<mosaic_0001>
module attributes {stable_mosaic.version = 11 : i64} {
  func.func @channel_mixing_kernel(%arg0: i32, %arg1: i32, %arg2: memref<1x8x32xf32, #tpu.memory_space<vmem>>, %arg3: memref<1x32xf32, #tpu.memory_space<vmem>>, %arg4: memref<1x32xf32, #tpu.memory_space<vmem>>, %arg5: memref<32x32xf32, #tpu.memory_space<vmem>>, %arg6: memref<32x32xf32, #tpu.memory_space<vmem>>, %arg7: memref<32x32xf32, #tpu.memory_space<vmem>>, %arg8: memref<1x8x32xf32, #tpu.memory_space<vmem>>, %arg9: memref<1x32xf32, #tpu.memory_space<vmem>>) attributes {dimension_semantics = [#tpu.dimension_semantics<parallel>, #tpu.dimension_semantics<arbitrary>], iteration_bounds = array<i64: 2, 2>, scalar_prefetch = 0 : i64, scratch_operands = 1 : i64, tpu.core_type = #tpu.core_type<tc>, window_params = [{transform_indices = @transform_0, window_bounds = array<i64: 1, 8, 32>}, {pipeline_mode = #tpu.pipeline_mode<synchronous>, transform_indices = @transform_1, window_bounds = array<i64: 1, 32>}, {pipeline_mode = #tpu.pipeline_mode<synchronous>, transform_indices = @transform_2, window_bounds = array<i64: 1, 32>}, {pipeline_mode = #tpu.pipeline_mode<synchronous>, transform_indices = @transform_3, window_bounds = array<i64: 32, 32>}, {pipeline_mode = #tpu.pipeline_mode<synchronous>, transform_indices = @transform_4, window_bounds = array<i64: 32, 32>}, {pipeline_mode = #tpu.pipeline_mode<synchronous>, transform_indices = @transform_5, window_bounds = array<i64: 32, 32>}, {transform_indices = @transform_6, window_bounds = array<i64: 1, 8, 32>}]} {
    %c0_i32 = arith.constant 0 : i32
    %0 = arith.cmpi eq, %arg1, %c0_i32 : i32
    %1 = arith.extui %0 : i1 to i32
    %c0_i32_0 = arith.constant 0 : i32
    %2 = arith.cmpi ne, %1, %c0_i32_0 : i32
    scf.if %2 {
      %cst_25 = arith.constant 0.000000e+00 : f32
      %42 = vector.broadcast %cst_25 : f32 to vector<1x32xf32>
      %c0_26 = arith.constant 0 : index
      %c0_27 = arith.constant 0 : index
      %43 = vector.load %arg9[%c0_26, %c0_27] : memref<1x32xf32, #tpu.memory_space<vmem>>, vector<1x32xf32>
      tpu.vector_store %arg9[%c0_26, %c0_27], %42 {strides = array<i32>} : memref<1x32xf32, #tpu.memory_space<vmem>>, vector<1x32xf32>,
    } else {
    }
    %c0 = arith.constant 0 : index
    %c0_1 = arith.constant 0 : index
    %c0_2 = arith.constant 0 : index
    %3 = vector.load %arg2[%c0, %c0_1, %c0_2] : memref<1x8x32xf32, #tpu.memory_space<vmem>>, vector<1x8x32xf32>
    %4 = vector.shape_cast %3 : vector<1x8x32xf32> to vector<8x32xf32>
    %c0_3 = arith.constant 0 : index
    %c0_4 = arith.constant 0 : index
    %5 = vector.load %arg9[%c0_3, %c0_4] : memref<1x32xf32, #tpu.memory_space<vmem>>, vector<1x32xf32>
    %c1_i32 = arith.constant 1 : i32
    %6 = tpu.dynamic_rotate %4 by %c1_i32 dim 0 : vector<8x32xf32>, i32 -> vector<8x32xf32>
    %7 = tpu.iota {dimensions = array<i32: 0>} : vector<8x32xi32>
    %c0_i32_5 = arith.constant 0 : i32
    %8 = vector.broadcast %c0_i32_5 : i32 to vector<8x32xi32>
    %9 = arith.cmpi eq, %7, %8 : vector<8x32xi32>
    %10 = vector.shape_cast %5 : vector<1x32xf32> to vector<1x32xf32>
    %11 = vector.broadcast %10 : vector<1x32xf32> to vector<8x32xf32>
    %12 = arith.select %9, %11, %6 : vector<8x32xi1>, vector<8x32xf32>
    %13 = vector.extract_strided_slice %4 {offsets = [7, 0], sizes = [1, 32], strides = [1, 1]} : vector<8x32xf32> to vector<1x32xf32>
    %c0_6 = arith.constant 0 : index
    %c0_7 = arith.constant 0 : index
    %14 = vector.load %arg9[%c0_6, %c0_7] : memref<1x32xf32, #tpu.memory_space<vmem>>, vector<1x32xf32>
    tpu.vector_store %arg9[%c0_6, %c0_7], %13 {strides = array<i32>} : memref<1x32xf32, #tpu.memory_space<vmem>>, vector<1x32xf32>,
    %c0_8 = arith.constant 0 : index
    %c0_9 = arith.constant 0 : index
    %15 = vector.load %arg3[%c0_8, %c0_9] : memref<1x32xf32, #tpu.memory_space<vmem>>, vector<1x32xf32>
    %c0_10 = arith.constant 0 : index
    %c0_11 = arith.constant 0 : index
    %16 = vector.load %arg4[%c0_10, %c0_11] : memref<1x32xf32, #tpu.memory_space<vmem>>, vector<1x32xf32>
    %17 = arith.subf %4, %12 : vector<8x32xf32>
    %18 = vector.broadcast %15 : vector<1x32xf32> to vector<8x32xf32>
    %19 = arith.mulf %17, %18 : vector<8x32xf32>
    %20 = arith.addf %12, %19 : vector<8x32xf32>
    %21 = vector.broadcast %16 : vector<1x32xf32> to vector<8x32xf32>
    %22 = arith.mulf %17, %21 : vector<8x32xf32>
    %23 = arith.addf %12, %22 : vector<8x32xf32>
    %c0_12 = arith.constant 0 : index
    %c0_13 = arith.constant 0 : index
    %24 = vector.load %arg5[%c0_12, %c0_13] : memref<32x32xf32, #tpu.memory_space<vmem>>, vector<32x32xf32>
    %cst = arith.constant dense<0.000000e+00> : vector<8x32xf32>
    %25 = tpu.matmul %20, %24, %cst {dimension_numbers = #tpu.dot_dimension_numbers<[1], [0], [0], [1], [0, 0, 1, 1], [], []>} : vector<8x32xf32>, vector<32x32xf32>, vector<8x32xf32> -> vector<8x32xf32>
    %cst_14 = arith.constant 0.000000e+00 : f32
    %26 = vector.broadcast %cst_14 : f32 to vector<8x32xf32>
    %27 = arith.maximumf %25, %26 : vector<8x32xf32>
    %28 = arith.mulf %27, %27 : vector<8x32xf32>
    %c0_15 = arith.constant 0 : index
    %c0_16 = arith.constant 0 : index
    %29 = vector.load %arg6[%c0_15, %c0_16] : memref<32x32xf32, #tpu.memory_space<vmem>>, vector<32x32xf32>
    %cst_17 = arith.constant dense<0.000000e+00> : vector<8x32xf32>
    %30 = tpu.matmul %28, %29, %cst_17 {dimension_numbers = #tpu.dot_dimension_numbers<[1], [0], [0], [1], [0, 0, 1, 1], [], []>} : vector<8x32xf32>, vector<32x32xf32>, vector<8x32xf32> -> vector<8x32xf32>
    %c0_18 = arith.constant 0 : index
    %c0_19 = arith.constant 0 : index
    %31 = vector.load %arg7[%c0_18, %c0_19] : memref<32x32xf32, #tpu.memory_space<vmem>>, vector<32x32xf32>
    %cst_20 = arith.constant dense<0.000000e+00> : vector<8x32xf32>
    %32 = tpu.matmul %23, %31, %cst_20 {dimension_numbers = #tpu.dot_dimension_numbers<[1], [0], [0], [1], [0, 0, 1, 1], [], []>} : vector<8x32xf32>, vector<32x32xf32>, vector<8x32xf32> -> vector<8x32xf32>
    %33 = arith.negf %32 : vector<8x32xf32>
    %34 = math.exp %33 : vector<8x32xf32>
    %cst_21 = arith.constant 1.000000e+00 : f32
    %35 = vector.broadcast %cst_21 : f32 to vector<8x32xf32>
    %36 = arith.addf %35, %34 : vector<8x32xf32>
    %37 = arith.divf %35, %36 : vector<8x32xf32>
    %38 = arith.mulf %37, %30 : vector<8x32xf32>
    %c0_22 = arith.constant 0 : index
    %c0_23 = arith.constant 0 : index
    %c0_24 = arith.constant 0 : index
    %39 = vector.load %arg8[%c0_22, %c0_23, %c0_24] : memref<1x8x32xf32, #tpu.memory_space<vmem>>, vector<1x8x32xf32>
    %40 = vector.shape_cast %39 : vector<1x8x32xf32> to vector<8x32xf32>
    %41 = vector.shape_cast %38 : vector<8x32xf32> to vector<1x8x32xf32>
    tpu.vector_store %arg8[%c0_22, %c0_23, %c0_24], %41 {strides = array<i32>} : memref<1x8x32xf32, #tpu.memory_space<vmem>>, vector<1x8x32xf32>,
    return
  }
  func.func @transform_0(%arg0: i32, %arg1: i32) -> (i32, i32, i32) {
    %c0_i32 = arith.constant 0 : i32
    %c0_i32_0 = arith.constant 0 : i32
    return %arg0, %arg1, %c0_i32 : i32, i32, i32
  }
  func.func @transform_1(%arg0: i32, %arg1: i32) -> (i32, i32) {
    %c0_i32 = arith.constant 0 : i32
    %c0_i32_0 = arith.constant 0 : i32
    %c0_i32_1 = arith.constant 0 : i32
    return %c0_i32, %c0_i32_0 : i32, i32
  }
  func.func @transform_2(%arg0: i32, %arg1: i32) -> (i32, i32) {
    %c0_i32 = arith.constant 0 : i32
    %c0_i32_0 = arith.constant 0 : i32
    %c0_i32_1 = arith.constant 0 : i32
    return %c0_i32, %c0_i32_0 : i32, i32
  }
  func.func @transform_3(%arg0: i32, %arg1: i32) -> (i32, i32) {
    %c0_i32 = arith.constant 0 : i32
    %c0_i32_0 = arith.constant 0 : i32
    %c0_i32_1 = arith.constant 0 : i32
    return %c0_i32, %c0_i32_0 : i32, i32
  }
  func.func @transform_4(%arg0: i32, %arg1: i32) -> (i32, i32) {
    %c0_i32 = arith.constant 0 : i32
    %c0_i32_0 = arith.constant 0 : i32
    %c0_i32_1 = arith.constant 0 : i32
    return %c0_i32, %c0_i32_0 : i32, i32
  }
  func.func @transform_5(%arg0: i32, %arg1: i32) -> (i32, i32) {
    %c0_i32 = arith.constant 0 : i32
    %c0_i32_0 = arith.constant 0 : i32
    %c0_i32_1 = arith.constant 0 : i32
    return %c0_i32, %c0_i32_0 : i32, i32
  }
  func.func @transform_6(%arg0: i32, %arg1: i32) -> (i32, i32, i32) {
    %c0_i32 = arith.constant 0 : i32
    %c0_i32_0 = arith.constant 0 : i32
    return %arg0, %arg1, %c0_i32 : i32, i32, i32
  }
}

</mosaic_0001>

<llo_original>
// kernel: tpu_custom_call.1
$region0: #{tpu_custom_call.1}
  #allocation0 [shape = 'u32[]', space=smem, size = 0x4, offset = 0x4, fixed_abs, tag = 'smem constant byte address 0x4 - core index']
  #allocation1 [shape = 'u32[144,128]{1,0:T(1,128)}', space=vmem, size = 0x12000, scoped, tag = 'internal scratch']
  #allocation2 [shape = 'f32[1,32]{1,0:T(1,128)}', space=vmem, size = 0x200, scoped, tag = 'scratch operand']
  %s0 = inlined_call_operand.hbm [shape: f32[2,16,32], index: 0, kind: input, shape index: {}]
  %s1 = inlined_call_operand.vmem [shape: f32[1,32], index: 1, kind: input, shape index: {}]
  %s2 = inlined_call_operand.vmem [shape: f32[1,32], index: 2, kind: input, shape index: {}]
  %s3 = inlined_call_operand.hbm [shape: f32[32,32], index: 3, kind: input, shape index: {}]
  %s4 = inlined_call_operand.hbm [shape: f32[32,32], index: 4, kind: input, shape index: {}]
  %s5 = inlined_call_operand.hbm [shape: f32[32,32], index: 5, kind: input, shape index: {}]
  %s6 = inlined_call_operand.hbm [shape: f32[2,16,32], index: 6, kind: output, shape index: {}]
  %s7 = sld [smem:[#allocation0]]
  $region77: #{tpu_custom_call.1} parent=0
    _
  %s9 = ssub.s32 1, %s7
  %s10 = scalar_select 0, %s9, %s7
  $region1: #{tpu_custom_call.1} parent=0
    #allocation3 [shape = 'u8[8192]{0}', space=vmem, size = 0x2000, scoped, tag = 'input window, operand 0']
    #allocation4 [shape = 's32[2]{0}', space=sflag, size = 0x8, scoped, tag = 'scoped memory for tpu_custom_call.1']
    #allocation5 [shape = 's32[2]{0}', space=sflag, size = 0x8, scoped, tag = 'scoped memory for tpu_custom_call.1']
    #allocation6 [shape = 'u8[16384]{0}', space=vmem, size = 0x4000, scoped, tag = 'input window, operand 3, single buffered']
    #allocation7 [shape = 's32[1]{0}', space=sflag, size = 0x4, scoped, tag = 'scoped memory for tpu_custom_call.1']
    #allocation8 [shape = 'u8[16384]{0}', space=vmem, size = 0x4000, scoped, tag = 'input window, operand 4, single buffered']
    #allocation9 [shape = 'u8[16384]{0}', space=vmem, size = 0x4000, scoped, tag = 'input window, operand 5, single buffered']
    #allocation10 [shape = 's32[1]{0}', space=sflag, size = 0x4, scoped, tag = 'scoped memory for tpu_custom_call.1']
    #allocation11 [shape = 'u8[8192]{0}', space=vmem, size = 0x2000, scoped, tag = 'output window, operand 0']
    %11 = vsyncpa [#allocation4], 0
    %s12 = scalar_lea.sflag [#allocation4], 1
    %13 = vsyncpa %s12, 0
    %14 = vsyncpa [#allocation7], 0
    %15 = vsyncpa [#allocation10], 0
    %16 = vsyncpa [#allocation5], 0
    %s17 = scalar_lea.sflag [#allocation5], 1
    %18 = vsyncpa %s17, 0
    loop: start=0, step=1, limit=6
    $region2: #{tpu_custom_call.1} parent=1 // loop_pre_header
      _
    $region3: #{tpu_custom_call.1} parent=1 // loop_header
      %s20 = sphi 0, %s24
      %p21 = scmp.ge.s32.totalorder %s20, 6
      %s27 = sphi 0, %s39
      %s28 = sphi 0, %s35
      %s29 = sphi 0, %s27
      %s30 = sphi 0, %s28
      %s31 = sphi 0, %s29
      %s32 = sphi 0, %s30
      %s44 = sphi 0, %s46
      %s47 = sphi 0, %s44
      %s48 = sphi 0, %s47
      %s64 = sphi 0, %s48
      %s68 = sphi 0, %s68
      %s70 = sphi 0, %s68
      %s71 = sphi 0, %s70
      %s85 = sphi 0, %s71
      %s89 = sphi 0, %s89
      %s91 = sphi 0, %s89
      %s92 = sphi 0, %s91
      %s106 = sphi 0, %s92
      %s110 = sphi 0, %s110
      %s112 = sphi 0, %s110
      %s113 = sphi 0, %s112
      %s127 = sphi 0, %s113
      %s131 = sphi 0, %s131
      %s133 = sphi 0, %s131
      %s134 = sphi 0, %s133
      %s148 = sphi 0, %s134
      %s152 = sphi 0, %s152
      %s154 = sphi 0, %s152
      %s155 = sphi 0, %s154
      %s169 = sphi 0, %s155
      %s177 = sphi 0, %s179
      %s180 = sphi 0, %s177
      %s181 = sphi 0, %s180
      %s197 = sphi 0, %s181
    $region4: #{tpu_custom_call.1} parent=1 // loop_header_branch
      %23 = sbr.rel (%p21) target = $region8
    $region5: #{tpu_custom_call.1} parent=1 // loop_body
      %s25 = ssub.s32 %s20, 1
      %s26 = ssub.s32 %s20, 2
      %s33 = sadd.s32 1, %s28
      %p34 = scmp.ge.s32.totalorder %s33, 2
      %s35 = scalar_select %p34, 0, %s33
      %s36 = sadd.s32 1, %s27
      %s37 = scalar_select %p34, %s36, %s27
      %p38 = scmp.ge.s32.totalorder %s37, 2
      %s39 = scalar_select %p38, 0, %s37
      %s40 = ssub.s32 %s27, %s39
      %s41 = ssub.s32 %s28, %s35
      %s42 = sor.u32 %s40, %s41
      %p43 = scmp.eq.s32.totalorder %s42, 0
      %s45 = sadd.s32 %s44, 1
      %s46 = scalar_select %p43, %s44, %s45
      %p49 = pneg %p43
      %p50 = scmp.eq.s32.totalorder %s20, 3
      %p51 = por %p49, %p50
      %p52 = scmp.ne.s32.totalorder %s44, %s47
      %p53 = scmp.eq.s32.totalorder %s20, 0
      %p54 = por %p52, %p53
      %p55 = scmp.ne.s32.totalorder %s44, %s47
      %p56 = scmp.eq.s32.totalorder %s25, 3
      %p57 = por %p55, %p56
      %p58 = scmp.ne.s32.totalorder %s47, %s48
      %p59 = scmp.eq.s32.totalorder %s25, 0
      %p60 = por %p58, %p59
      %p61 = scmp.ne.s32.totalorder %s47, %s48
      %p62 = scmp.eq.s32.totalorder %s26, 3
      %p63 = por %p61, %p62
      %p65 = scmp.ne.s32.totalorder %s48, %s64
      %p66 = scmp.eq.s32.totalorder %s26, 0
      %p67 = por %p65, %p66
      %s69 = sadd.s32 %s68, 1
      %p72 = scmp.eq.s32.totalorder %s20, 3
      %p73 = scmp.ne.s32.totalorder %s68, %s70
      %p74 = scmp.eq.s32.totalorder %s20, 0
      %p75 = por %p73, %p74
      %p76 = scmp.ne.s32.totalorder %s68, %s70
      %p77 = scmp.eq.s32.totalorder %s25, 3
      %p78 = por %p76, %p77
      %p79 = scmp.ne.s32.totalorder %s70, %s71
      %p80 = scmp.eq.s32.totalorder %s25, 0
      %p81 = por %p79, %p80
      %p82 = scmp.ne.s32.totalorder %s70, %s71
      %p83 = scmp.eq.s32.totalorder %s26, 3
      %p84 = por %p82, %p83
      %p86 = scmp.ne.s32.totalorder %s71, %s85
      %p87 = scmp.eq.s32.totalorder %s26, 0
      %p88 = por %p86, %p87
      %s90 = sadd.s32 %s89, 1
      %p93 = scmp.eq.s32.totalorder %s20, 3
      %p94 = scmp.ne.s32.totalorder %s89, %s91
      %p95 = scmp.eq.s32.totalorder %s20, 0
      %p96 = por %p94, %p95
      %p97 = scmp.ne.s32.totalorder %s89, %s91
      %p98 = scmp.eq.s32.totalorder %s25, 3
      %p99 = por %p97, %p98
      %p100 = scmp.ne.s32.totalorder %s91, %s92
      %p101 = scmp.eq.s32.totalorder %s25, 0
      %p102 = por %p100, %p101
      %p103 = scmp.ne.s32.totalorder %s91, %s92
      %p104 = scmp.eq.s32.totalorder %s26, 3
      %p105 = por %p103, %p104
      %p107 = scmp.ne.s32.totalorder %s92, %s106
      %p108 = scmp.eq.s32.totalorder %s26, 0
      %p109 = por %p107, %p108
      %s111 = sadd.s32 %s110, 1
      %p114 = scmp.eq.s32.totalorder %s20, 3
      %p115 = scmp.ne.s32.totalorder %s110, %s112
      %p116 = scmp.eq.s32.totalorder %s20, 0
      %p117 = por %p115, %p116
      %p118 = scmp.ne.s32.totalorder %s110, %s112
      %p119 = scmp.eq.s32.totalorder %s25, 3
      %p120 = por %p118, %p119
      %p121 = scmp.ne.s32.totalorder %s112, %s113
      %p122 = scmp.eq.s32.totalorder %s25, 0
      %p123 = por %p121, %p122
      %p124 = scmp.ne.s32.totalorder %s112, %s113
      %p125 = scmp.eq.s32.totalorder %s26, 3
      %p126 = por %p124, %p125
      %p128 = scmp.ne.s32.totalorder %s113, %s127
      %p129 = scmp.eq.s32.totalorder %s26, 0
      %p130 = por %p128, %p129
      %s132 = sadd.s32 %s131, 1
      %p135 = scmp.eq.s32.totalorder %s20, 3
      %p136 = scmp.ne.s32.totalorder %s131, %s133
      %p137 = scmp.eq.s32.totalorder %s20, 0
      %p138 = por %p136, %p137
      %p139 = scmp.ne.s32.totalorder %s131, %s133
      %p140 = scmp.eq.s32.totalorder %s25, 3
      %p141 = por %p139, %p140
      %p142 = scmp.ne.s32.totalorder %s133, %s134
      %p143 = scmp.eq.s32.totalorder %s25, 0
      %p144 = por %p142, %p143
      %p145 = scmp.ne.s32.totalorder %s133, %s134
      %p146 = scmp.eq.s32.totalorder %s26, 3
      %p147 = por %p145, %p146
      %p149 = scmp.ne.s32.totalorder %s134, %s148
      %p150 = scmp.eq.s32.totalorder %s26, 0
      %p151 = por %p149, %p150
      %s153 = sadd.s32 %s152, 1
      %p156 = scmp.eq.s32.totalorder %s20, 3
      %p157 = scmp.ne.s32.totalorder %s152, %s154
      %p158 = scmp.eq.s32.totalorder %s20, 0
      %p159 = por %p157, %p158
      %p160 = scmp.ne.s32.totalorder %s152, %s154
      %p161 = scmp.eq.s32.totalorder %s25, 3
      %p162 = por %p160, %p161
      %p163 = scmp.ne.s32.totalorder %s154, %s155
      %p164 = scmp.eq.s32.totalorder %s25, 0
      %p165 = por %p163, %p164
      %p166 = scmp.ne.s32.totalorder %s154, %s155
      %p167 = scmp.eq.s32.totalorder %s26, 3
      %p168 = por %p166, %p167
      %p170 = scmp.ne.s32.totalorder %s155, %s169
      %p171 = scmp.eq.s32.totalorder %s26, 0
      %p172 = por %p170, %p171
      %s173 = ssub.s32 %s27, %s39
      %s174 = ssub.s32 %s28, %s35
      %s175 = sor.u32 %s173, %s174
      %p176 = scmp.eq.s32.totalorder %s175, 0
      %s178 = sadd.s32 %s177, 1
      %s179 = scalar_select %p176, %s177, %s178
      %p182 = pneg %p176
      %p183 = scmp.eq.s32.totalorder %s20, 3
      %p184 = por %p182, %p183
      %p185 = scmp.ne.s32.totalorder %s177, %s180
      %p186 = scmp.eq.s32.totalorder %s20, 0
      %p187 = por %p185, %p186
      %p188 = scmp.ne.s32.totalorder %s177, %s180
      %p189 = scmp.eq.s32.totalorder %s25, 3
      %p190 = por %p188, %p189
      %p191 = scmp.ne.s32.totalorder %s180, %s181
      %p192 = scmp.eq.s32.totalorder %s25, 0
      %p193 = por %p191, %p192
      %p194 = scmp.ne.s32.totalorder %s180, %s181
      %p195 = scmp.eq.s32.totalorder %s26, 3
      %p196 = por %p194, %p195
      %p198 = scmp.ne.s32.totalorder %s181, %s197
      %p199 = scmp.eq.s32.totalorder %s26, 0
      %p200 = por %p198, %p199
      %p201 = scmp.le.s32.totalorder 1, %s20
      %p202 = scmp.lt.s32.totalorder %s20, 5
      %p203 = pnand %p201, %p202
      %p204 = pneg %p203
      // Predicated region
      $region9: #{tpu_custom_call.1} parent=5 // pred_check
        _
      $region10: #{tpu_custom_call.1} parent=5 // pred_check_branch
        %206 = sbr.rel (%p203) target = $region12
      $region11: #{tpu_custom_call.1} parent=5 // pred_region
        %s207 = ssub.s32 %s20, 1
        // Predicated region
        $region13: #{tpu_custom_call.1} parent=11 // pred_check
          %p208 = pneg %p81
        $region14: #{tpu_custom_call.1} parent=11 // pred_check_branch
          %210 = sbr.rel (%p208) target = $region16
        $region15: #{tpu_custom_call.1} parent=11 // pred_region
          _
        $region16: #{tpu_custom_call.1} parent=11 // pred_fallthru
          _
        // Predicated region
        $region17: #{tpu_custom_call.1} parent=11 // pred_check
          %p211 = pneg %p102
        $region18: #{tpu_custom_call.1} parent=11 // pred_check_branch
          %213 = sbr.rel (%p211) target = $region20
        $region19: #{tpu_custom_call.1} parent=11 // pred_region
          _
        $region20: #{tpu_custom_call.1} parent=11 // pred_fallthru
          _
        // Predicated region
        $region21: #{tpu_custom_call.1} parent=11 // pred_check
          %p214 = pneg %p123
        $region22: #{tpu_custom_call.1} parent=11 // pred_check_branch
          %216 = sbr.rel (%p214) target = $region24
        $region23: #{tpu_custom_call.1} parent=11 // pred_region
          %s218 = ssub.s32 512, 512
          %219 = vsyncadd [#allocation7], %s218
          %s220 = sshll.u32 [#allocation6], 4
          %s221 = int_to_ptr.vmem [resolvable:$true] %s220
          %226 = dma.hbm_to_vmem [thread:$0]  %s3, 512, %s221, [#allocation7], 128, 128, 8
        $region24: #{tpu_custom_call.1} parent=11 // pred_fallthru
          _
        // Predicated region
        $region25: #{tpu_custom_call.1} parent=11 // pred_check
          %p227 = pneg %p144
        $region26: #{tpu_custom_call.1} parent=11 // pred_check_branch
          %229 = sbr.rel (%p227) target = $region28
        $region27: #{tpu_custom_call.1} parent=11 // pred_region
          %s231 = ssub.s32 512, 512
          %232 = vsyncadd [#allocation7], %s231
          %s233 = sshll.u32 [#allocation8], 4
          %s234 = int_to_ptr.vmem [resolvable:$true] %s233
          %239 = dma.hbm_to_vmem [thread:$0]  %s4, 512, %s234, [#allocation7], 128, 128, 8
        $region28: #{tpu_custom_call.1} parent=11 // pred_fallthru
          _
        // Predicated region
        $region29: #{tpu_custom_call.1} parent=11 // pred_check
          %p240 = pneg %p165
        $region30: #{tpu_custom_call.1} parent=11 // pred_check_branch
          %242 = sbr.rel (%p240) target = $region32
        $region31: #{tpu_custom_call.1} parent=11 // pred_region
          %s244 = ssub.s32 512, 512
          %245 = vsyncadd [#allocation10], %s244
          %s246 = sshll.u32 [#allocation9], 4
          %s247 = int_to_ptr.vmem [resolvable:$true] %s246
          %252 = dma.hbm_to_vmem [thread:$0]  %s5, 512, %s247, [#allocation10], 128, 128, 8
        $region32: #{tpu_custom_call.1} parent=11 // pred_fallthru
          _
      $region12: #{tpu_custom_call.1} parent=5 // pred_fallthru
        _
      %p253 = scmp.lt.s32.totalorder %s20, 4
      // Predicated region
      $region33: #{tpu_custom_call.1} parent=5 // pred_check
        %p254 = pneg %p253
      $region34: #{tpu_custom_call.1} parent=5 // pred_check_branch
        %256 = sbr.rel (%p254) target = $region36
      $region35: #{tpu_custom_call.1} parent=5 // pred_region
        // Predicated region
        $region37: #{tpu_custom_call.1} parent=35 // pred_check
          %p257 = pneg %p54
        $region38: #{tpu_custom_call.1} parent=35 // pred_check_branch
          %259 = sbr.rel (%p257) target = $region40
        $region39: #{tpu_custom_call.1} parent=35 // pred_region
          %s260 = sand.u32 %s44, 1
          %s261 = scalar_lea.sflag [#allocation4], %s260
          %s262 = sand.u32 %s44, 1
          %s263 = smul.addr %s262, 8
          %s264 = scalar_lea.vmem [#allocation3], %s263
          %s266 = ssub.s32 128, 128
          %267 = vsyncadd %s261, %s266
          %s268 = smul.addr %s27, 2
          %s269 = sadd.s32 %s28, %s268
          %s270 = smul.addr %s269, 128
          %s271 = scalar_lea.hbm %s0, %s270
          %s273 = sshll.u32 %s264, 4
          %s274 = int_to_ptr.vmem [resolvable:$true] %s273
          %276 = dma.hbm_to_vmem [thread:$0]  %s271, 128, %s274, %s261
        $region40: #{tpu_custom_call.1} parent=35 // pred_fallthru
          _
      $region36: #{tpu_custom_call.1} parent=5 // pred_fallthru
        _
      %p277 = scmp.le.s32.totalorder 1, %s20
      %p278 = scmp.lt.s32.totalorder %s20, 5
      %p279 = pnand %p277, %p278
      %p280 = pneg %p279
      // Predicated region
      $region41: #{tpu_custom_call.1} parent=5 // pred_check
        _
      $region42: #{tpu_custom_call.1} parent=5 // pred_check_branch
        %282 = sbr.rel (%p279) target = $region44
      $region43: #{tpu_custom_call.1} parent=5 // pred_region
        %s283 = ssub.s32 %s20, 1
        %s284 = sand.u32 %s47, 1
        %s285 = scalar_lea.sflag [#allocation4], %s284
        %s286 = sand.u32 %s47, 1
        %s287 = smul.addr %s286, 8
        %s288 = scalar_lea.vmem [#allocation3], %s287
        // Predicated region
        $region45: #{tpu_custom_call.1} parent=43 // pred_check
          %p289 = pneg %p60
        $region46: #{tpu_custom_call.1} parent=43 // pred_check_branch
          %291 = sbr.rel (%p289) target = $region48
        $region47: #{tpu_custom_call.1} parent=43 // pred_region
          %292 = dma.done %s285, 128
        $region48: #{tpu_custom_call.1} parent=43 // pred_fallthru
          _
        // Predicated region
        $region49: #{tpu_custom_call.1} parent=43 // pred_check
          %p293 = pneg %p123
        $region50: #{tpu_custom_call.1} parent=43 // pred_check_branch
          %295 = sbr.rel (%p293) target = $region52
        $region51: #{tpu_custom_call.1} parent=43 // pred_region
          %296 = dma.done [#allocation7], 512
        $region52: #{tpu_custom_call.1} parent=43 // pred_fallthru
          _
        // Predicated region
        $region53: #{tpu_custom_call.1} parent=43 // pred_check
          %p297 = pneg %p144
        $region54: #{tpu_custom_call.1} parent=43 // pred_check_branch
          %299 = sbr.rel (%p297) target = $region56
        $region55: #{tpu_custom_call.1} parent=43 // pred_region
          %300 = dma.done [#allocation7], 512
        $region56: #{tpu_custom_call.1} parent=43 // pred_fallthru
          _
        // Predicated region
        $region57: #{tpu_custom_call.1} parent=43 // pred_check
          %p301 = pneg %p165
        $region58: #{tpu_custom_call.1} parent=43 // pred_check_branch
          %303 = sbr.rel (%p301) target = $region60
        $region59: #{tpu_custom_call.1} parent=43 // pred_region
          %304 = dma.done [#allocation10], 512
        $region60: #{tpu_custom_call.1} parent=43 // pred_fallthru
          _
        %s305 = sand.u32 %s47, 1
        %s306 = scalar_lea.sflag [#allocation4], %s305
        %s307 = sand.u32 %s47, 1
        %s308 = smul.addr %s307, 8
        %s309 = scalar_lea.vmem [#allocation3], %s308
        %p310 = pneg %p60
        %p311 = pneg %p57
        %p312 = pneg %p81
        %p313 = pneg %p78
        %p314 = pneg %p102
        %p315 = pneg %p99
        %p316 = pneg %p123
        %p317 = pneg %p120
        %p318 = pneg %p144
        %p319 = pneg %p141
        %p320 = pneg %p165
        %p321 = pneg %p162
        %p322 = pneg %p193
        %p323 = pneg %p190
        %s324 = sand.u32 %s180, 1
        %s325 = scalar_lea.sflag [#allocation5], %s324
        %s326 = sand.u32 %s180, 1
        %s327 = smul.addr %s326, 8
        %s328 = scalar_lea.vmem [#allocation11], %s327
        %p329 = scmp.eq.s32.totalorder %s30, 0
        // Predicated region
        $region61: #{tpu_custom_call.1} parent=43 // pred_check
          %p330 = pneg %p329
        $region62: #{tpu_custom_call.1} parent=43 // pred_check_branch
          %332 = sbr.rel (%p330) target = $region64
        $region63: #{tpu_custom_call.1} parent=43 // pred_region
          %vm333 = vcmask 253952
          %334 = vst.msk [vmem:[#allocation2] sm:$0x1] %vm333, 0.0
        $region64: #{tpu_custom_call.1} parent=43 // pred_fallthru
          _
        %v335 = vld [vmem:[%s288] sm:$0xff]
        %v336 = vld [vmem:[#allocation2] sm:$0x1]
        %v337 = vrot.slane %v335, 7
        %v338 = vlaneseq
        %v339 = vshrl.u32 %v338, 7
        %vm340 = vcmp.eq.s32.totalorder %v339, 0
        %v342 = vlaneseq
        %v343 = vshrl.u32 %v342, 7
        %v344 = vsub.s32 0, %v343
        %v345 = vrot.slane %v336, %v344
        %v347 = vsel %vm340, %v345, %v337
        %vm348 = vcmask 261127
        %349 = vst.msk [vmem:[#allocation2 - $0x7] sm:$0x80] %vm348, %v335
        %v350 = vld [vmem:[%s1] sm:$0x1]
        %v351 = vld [vmem:[%s2] sm:$0x1]
        %v352 = vsub.f32 %v335, %v347
        %v354 = vlaneseq
        %v355 = vshrl.u32 %v354, 7
        %v356 = vsub.s32 0, %v355
        %v357 = vrot.slane %v350, %v356
        %v359 = vmul.f32 %v352, %v357
        %v360 = vadd.f32 %v347, %v359
        %v362 = vlaneseq
        %v363 = vshrl.u32 %v362, 7
        %v364 = vsub.s32 0, %v363
        %v365 = vrot.slane %v351, %v364
        %v367 = vmul.f32 %v352, %v365
        %v368 = vadd.f32 %v347, %v367
        %v369 = vld [vmem:[#allocation6] sm:$0xff]
        %v370 = vld [vmem:[#allocation6 + $0x8] sm:$0xff]
        %v371 = vld [vmem:[#allocation6 + $0x10] sm:$0xff]
        %v372 = vld [vmem:[#allocation6 + $0x18] sm:$0xff]
        %vm373 = vcmask 261120
        %v375 = vsel %vm373, %v360, 0
        %377 = vmatprep.subr.mxu0 0.0
        %378 = vmatpush1.msra.mxu0 %v369
        %379 = vmatprep.subr.mxu0 0.0
        %380 = vmatpush1.msra.mxu0 %v370
        %381 = vmatprep.subr.mxu0 0.0
        %382 = vmatpush1.msra.mxu0 %v371
        %383 = vmatprep.subr.mxu0 0.0
        %384 = vmatpush1.msra.mxu0 %v372
        %385 = vmatprep.subr.mxu0 0.0
        %386 = vmatpush1.msra.mxu0 0.0
        %387 = vmatprep.subr.mxu0 0.0
        %388 = vmatpush1.msra.mxu0 0.0
        %389 = vmatprep.subr.mxu0 0.0
        %390 = vmatpush1.msra.mxu0 0.0
        %391 = vmatprep.subr.mxu0 0.0
        %392 = vmatpush1.msra.mxu0 0.0
        %393 = vmatprep.subr.mxu0 0.0
        %394 = vmatpush1.msra.mxu0 0.0
        %395 = vmatprep.subr.mxu0 0.0
        %396 = vmatpush1.msra.mxu0 0.0
        %397 = vmatprep.subr.mxu0 0.0
        %398 = vmatpush1.msra.mxu0 0.0
        %399 = vmatprep.subr.mxu0 0.0
        %400 = vmatpush1.msra.mxu0 0.0
        %401 = vmatprep.subr.mxu0 0.0
        %402 = vmatpush1.msra.mxu0 0.0
        %403 = vmatprep.subr.mxu0 0.0
        %404 = vmatpush1.msra.mxu0 0.0
        %405 = vmatprep.subr.mxu0 0.0
        %406 = vmatpush1.msra.mxu0 0.0
        %407 = vmatprep.subr.mxu0 0.0
        %408 = vmatpush1.msra.mxu0 0.0
        %409 = vmatprep.subr.mxu0 0.0
        %410 = vmatpush1.msra.mxu0 0.0
        %411 = vmatprep.subr.mxu0 0.0
        %412 = vmatpush1.msra.mxu0 0.0
        %413 = vmatprep.subr.mxu0 0.0
        %414 = vmatpush1.msra.mxu0 0.0
        %415 = vmatprep.subr.mxu0 0.0
        %416 = vmatpush1.msra.mxu0 0.0
        %417 = vmatprep.subr.mxu0 0.0
        %418 = vmatpush1.msra.mxu0 0.0
        %419 = vmatprep.subr.mxu0 0.0
        %420 = vmatpush1.msra.mxu0 0.0
        %421 = vmatprep.subr.mxu0 0.0
        %422 = vmatpush1.msra.mxu0 0.0
        %423 = vmatprep.subr.mxu0 0.0
        %424 = vmatpush1.msra.mxu0 0.0
        %425 = vmatprep.subr.mxu0 0.0
        %426 = vmatpush1.msra.mxu0 0.0
        %427 = vmatprep.subr.mxu0 0.0
        %428 = vmatpush1.msra.mxu0 0.0
        %429 = vmatprep.subr.mxu0 0.0
        %430 = vmatpush1.msra.mxu0 0.0
        %431 = vmatprep.subr.mxu0 0.0
        %432 = vmatpush1.msra.mxu0 0.0
        %433 = vmatprep.subr.mxu0 0.0
        %434 = vmatpush1.msra.mxu0 0.0
        %435 = vmatprep.subr.mxu0 0.0
        %436 = vmatpush1.msra.mxu0 0.0
        %437 = vmatprep.subr.mxu0 0.0
        %438 = vmatpush1.msra.mxu0 0.0
        %439 = vmatprep.subr.mxu0 0.0
        %440 = vmatpush1.msra.mxu0 0.0
        %441 = vmatprep.mubr.f32.mxu0 0.0
        %442 = vmatmul.mubr.f32.gmra.mrb[0].mxu0 %v375
        %v443 = vpop.f32.mrb[0].mxu0
        %v444 = vadd.f32 0.0, %v443
        %v445 = vpop.f32.mrb[0].mxu0
        %446 = vdwg.mxu0
        %v447 = vmax.f32 %v444, 0.0
        %v448 = vmul.f32 %v447, %v447
        %v449 = vld [vmem:[#allocation8] sm:$0xff]
        %v450 = vld [vmem:[#allocation8 + $0x8] sm:$0xff]
        %v451 = vld [vmem:[#allocation8 + $0x10] sm:$0xff]
        %v452 = vld [vmem:[#allocation8 + $0x18] sm:$0xff]
        %v454 = vsel %vm373, %v448, 0
        %456 = vmatprep.subr.mxu0 0.0
        %457 = vmatpush1.msra.mxu0 %v449
        %458 = vmatprep.subr.mxu0 0.0
        %459 = vmatpush1.msra.mxu0 %v450
        %460 = vmatprep.subr.mxu0 0.0
        %461 = vmatpush1.msra.mxu0 %v451
        %462 = vmatprep.subr.mxu0 0.0
        %463 = vmatpush1.msra.mxu0 %v452
        %464 = vmatprep.subr.mxu0 0.0
        %465 = vmatpush1.msra.mxu0 0.0
        %466 = vmatprep.subr.mxu0 0.0
        %467 = vmatpush1.msra.mxu0 0.0
        %468 = vmatprep.subr.mxu0 0.0
        %469 = vmatpush1.msra.mxu0 0.0
        %470 = vmatprep.subr.mxu0 0.0
        %471 = vmatpush1.msra.mxu0 0.0
        %472 = vmatprep.subr.mxu0 0.0
        %473 = vmatpush1.msra.mxu0 0.0
        %474 = vmatprep.subr.mxu0 0.0
        %475 = vmatpush1.msra.mxu0 0.0
        %476 = vmatprep.subr.mxu0 0.0
        %477 = vmatpush1.msra.mxu0 0.0
        %478 = vmatprep.subr.mxu0 0.0
        %479 = vmatpush1.msra.mxu0 0.0
        %480 = vmatprep.subr.mxu0 0.0
        %481 = vmatpush1.msra.mxu0 0.0
        %482 = vmatprep.subr.mxu0 0.0
        %483 = vmatpush1.msra.mxu0 0.0
        %484 = vmatprep.subr.mxu0 0.0
        %485 = vmatpush1.msra.mxu0 0.0
        %486 = vmatprep.subr.mxu0 0.0
        %487 = vmatpush1.msra.mxu0 0.0
        %488 = vmatprep.subr.mxu0 0.0
        %489 = vmatpush1.msra.mxu0 0.0
        %490 = vmatprep.subr.mxu0 0.0
        %491 = vmatpush1.msra.mxu0 0.0
        %492 = vmatprep.subr.mxu0 0.0
        %493 = vmatpush1.msra.mxu0 0.0
        %494 = vmatprep.subr.mxu0 0.0
        %495 = vmatpush1.msra.mxu0 0.0
        %496 = vmatprep.subr.mxu0 0.0
        %497 = vmatpush1.msra.mxu0 0.0
        %498 = vmatprep.subr.mxu0 0.0
        %499 = vmatpush1.msra.mxu0 0.0
        %500 = vmatprep.subr.mxu0 0.0
        %501 = vmatpush1.msra.mxu0 0.0
        %502 = vmatprep.subr.mxu0 0.0
        %503 = vmatpush1.msra.mxu0 0.0
        %504 = vmatprep.subr.mxu0 0.0
        %505 = vmatpush1.msra.mxu0 0.0
        %506 = vmatprep.subr.mxu0 0.0
        %507 = vmatpush1.msra.mxu0 0.0
        %508 = vmatprep.subr.mxu0 0.0
        %509 = vmatpush1.msra.mxu0 0.0
        %510 = vmatprep.subr.mxu0 0.0
        %511 = vmatpush1.msra.mxu0 0.0
        %512 = vmatprep.subr.mxu0 0.0
        %513 = vmatpush1.msra.mxu0 0.0
        %514 = vmatprep.subr.mxu0 0.0
        %515 = vmatpush1.msra.mxu0 0.0
        %516 = vmatprep.subr.mxu0 0.0
        %517 = vmatpush1.msra.mxu0 0.0
        %518 = vmatprep.subr.mxu0 0.0
        %519 = vmatpush1.msra.mxu0 0.0
        %520 = vmatprep.mubr.f32.mxu0 0.0
        %521 = vmatmul.mubr.f32.gmra.mrb[0].mxu0 %v454
        %v522 = vpop.f32.mrb[0].mxu0
        %v523 = vadd.f32 0.0, %v522
        %v524 = vpop.f32.mrb[0].mxu0
        %525 = vdwg.mxu0
        %v526 = vld [vmem:[#allocation9] sm:$0xff]
        %v527 = vld [vmem:[#allocation9 + $0x8] sm:$0xff]
        %v528 = vld [vmem:[#allocation9 + $0x10] sm:$0xff]
        %v529 = vld [vmem:[#allocation9 + $0x18] sm:$0xff]
        %v531 = vsel %vm373, %v368, 0
        %533 = vmatprep.subr.mxu0 0.0
        %534 = vmatpush1.msra.mxu0 %v526
        %535 = vmatprep.subr.mxu0 0.0
        %536 = vmatpush1.msra.mxu0 %v527
        %537 = vmatprep.subr.mxu0 0.0
        %538 = vmatpush1.msra.mxu0 %v528
        %539 = vmatprep.subr.mxu0 0.0
        %540 = vmatpush1.msra.mxu0 %v529
        %541 = vmatprep.subr.mxu0 0.0
        %542 = vmatpush1.msra.mxu0 0.0
        %543 = vmatprep.subr.mxu0 0.0
        %544 = vmatpush1.msra.mxu0 0.0
        %545 = vmatprep.subr.mxu0 0.0
        %546 = vmatpush1.msra.mxu0 0.0
        %547 = vmatprep.subr.mxu0 0.0
        %548 = vmatpush1.msra.mxu0 0.0
        %549 = vmatprep.subr.mxu0 0.0
        %550 = vmatpush1.msra.mxu0 0.0
        %551 = vmatprep.subr.mxu0 0.0
        %552 = vmatpush1.msra.mxu0 0.0
        %553 = vmatprep.subr.mxu0 0.0
        %554 = vmatpush1.msra.mxu0 0.0
        %555 = vmatprep.subr.mxu0 0.0
        %556 = vmatpush1.msra.mxu0 0.0
        %557 = vmatprep.subr.mxu0 0.0
        %558 = vmatpush1.msra.mxu0 0.0
        %559 = vmatprep.subr.mxu0 0.0
        %560 = vmatpush1.msra.mxu0 0.0
        %561 = vmatprep.subr.mxu0 0.0
        %562 = vmatpush1.msra.mxu0 0.0
        %563 = vmatprep.subr.mxu0 0.0
        %564 = vmatpush1.msra.mxu0 0.0
        %565 = vmatprep.subr.mxu0 0.0
        %566 = vmatpush1.msra.mxu0 0.0
        %567 = vmatprep.subr.mxu0 0.0
        %568 = vmatpush1.msra.mxu0 0.0
        %569 = vmatprep.subr.mxu0 0.0
        %570 = vmatpush1.msra.mxu0 0.0
        %571 = vmatprep.subr.mxu0 0.0
        %572 = vmatpush1.msra.mxu0 0.0
        %573 = vmatprep.subr.mxu0 0.0
        %574 = vmatpush1.msra.mxu0 0.0
        %575 = vmatprep.subr.mxu0 0.0
        %576 = vmatpush1.msra.mxu0 0.0
        %577 = vmatprep.subr.mxu0 0.0
        %578 = vmatpush1.msra.mxu0 0.0
        %579 = vmatprep.subr.mxu0 0.0
        %580 = vmatpush1.msra.mxu0 0.0
        %581 = vmatprep.subr.mxu0 0.0
        %582 = vmatpush1.msra.mxu0 0.0
        %583 = vmatprep.subr.mxu0 0.0
        %584 = vmatpush1.msra.mxu0 0.0
        %585 = vmatprep.subr.mxu0 0.0
        %586 = vmatpush1.msra.mxu0 0.0
        %587 = vmatprep.subr.mxu0 0.0
        %588 = vmatpush1.msra.mxu0 0.0
        %589 = vmatprep.subr.mxu0 0.0
        %590 = vmatpush1.msra.mxu0 0.0
        %591 = vmatprep.subr.mxu0 0.0
        %592 = vmatpush1.msra.mxu0 0.0
        %593 = vmatprep.subr.mxu0 0.0
        %594 = vmatpush1.msra.mxu0 0.0
        %595 = vmatprep.subr.mxu0 0.0
        %596 = vmatpush1.msra.mxu0 0.0
        %597 = vmatprep.mubr.f32.mxu0 0.0
        %598 = vmatmul.mubr.f32.gmra.mrb[0].mxu0 %v531
        %v599 = vpop.f32.mrb[0].mxu0
        %v600 = vadd.f32 0.0, %v599
        %v601 = vpop.f32.mrb[0].mxu0
        %602 = vdwg.mxu0
        %v603 = vxor.u32 %v600, 2147483648
        %v604 = vmul.f32 %v603, 1.442695
        %v605 = vpow.pop %v604
        %v606 = vadd.f32 %v605, 1.0
        %v607 = vrcp.pop %v606
        %v608 = vmul.f32 1.0, %v607
        %v609 = vmul.f32 %v608, %v523
        %610 = vst.msk [vmem:[%s328] sm:$0xff] %vm373, %v609
        %s611 = sand.u32 %s180, 1
        %s612 = scalar_lea.sflag [#allocation5], %s611
        %s613 = sand.u32 %s180, 1
        %s614 = smul.addr %s613, 8
        %s615 = scalar_lea.vmem [#allocation11], %s614
        // Predicated region
        $region65: #{tpu_custom_call.1} parent=43 // pred_check
          %p616 = pneg %p190
        $region66: #{tpu_custom_call.1} parent=43 // pred_check_branch
          %618 = sbr.rel (%p616) target = $region68
        $region67: #{tpu_custom_call.1} parent=43 // pred_region
          %s620 = ssub.s32 128, 128
          %621 = vsyncadd %s612, %s620
          %s622 = smul.addr %s29, 2
          %s623 = sadd.s32 %s30, %s622
          %s624 = smul.addr %s623, 128
          %s625 = scalar_lea.hbm %s6, %s624
          %s627 = sshll.u32 %s615, 4
          %s628 = int_to_ptr.vmem [resolvable:$true] %s627
          %630 = dma.vmem_to_hbm [thread:$0]  %s628, 128, %s625, %s612
        $region68: #{tpu_custom_call.1} parent=43 // pred_fallthru
          _
      $region44: #{tpu_custom_call.1} parent=5 // pred_fallthru
        _
      %p631 = scmp.le.s32.totalorder 2, %s20
      // Predicated region
      $region69: #{tpu_custom_call.1} parent=5 // pred_check
        %p632 = pneg %p631
      $region70: #{tpu_custom_call.1} parent=5 // pred_check_branch
        %634 = sbr.rel (%p632) target = $region72
      $region71: #{tpu_custom_call.1} parent=5 // pred_region
        %s635 = ssub.s32 %s20, 2
        // Predicated region
        $region73: #{tpu_custom_call.1} parent=71 // pred_check
          %p636 = pneg %p196
        $region74: #{tpu_custom_call.1} parent=71 // pred_check_branch
          %638 = sbr.rel (%p636) target = $region76
        $region75: #{tpu_custom_call.1} parent=71 // pred_region
          %s639 = sand.u32 %s181, 1
          %s640 = scalar_lea.sflag [#allocation5], %s639
          %s641 = sand.u32 %s181, 1
          %s642 = smul.addr %s641, 8
          %s643 = scalar_lea.vmem [#allocation11], %s642
          %644 = dma.done %s640, 128
        $region76: #{tpu_custom_call.1} parent=71 // pred_fallthru
          _
      $region72: #{tpu_custom_call.1} parent=5 // pred_fallthru
        _
    $region6: #{tpu_custom_call.1} parent=1 // loop_footer
      %s24 = sadd.s32 1, %s20
    $region7: #{tpu_custom_call.1} parent=1 // loop_footer_branch
      %19 = sbr.rel target = $region3
    $region8: #{tpu_custom_call.1} parent=1 // loop_exit
      _
    %645 = vsyncpa [#allocation4], 1
    %s646 = scalar_lea.sflag [#allocation4], 1
    %647 = vsyncpa %s646, 1
    %648 = vsyncpa [#allocation7], 1
    %649 = vsyncpa [#allocation10], 1
    %650 = vsyncpa [#allocation5], 1
    %s651 = scalar_lea.sflag [#allocation5], 1
    %652 = vsyncpa %s651, 1

</llo_original>
